<compile_context>
chip_gen: v7x
topology: tpu7x:2x2x1
jax: 0.10.0
libtpu: 0.0.40
codegen_flags: <defaults>
</compile_context>

<pallas_src>
import functools

import jax
import jax.numpy as jnp
from jax.experimental import pallas as pl
from jax.experimental.pallas import tpu as pltpu

EPS = 1e-5  # PyTorch nn.LayerNorm default


def _round_up(x, m):
    return (x + m - 1) // m * m


def _sublane_pack(dtype):
    # Sub-32-bit dtypes pack rows into sublanes: f32 -> 8, bf16 -> 16, int8 -> 32.
    itemsize = jnp.dtype(dtype).itemsize
    return 8 * max(1, 4 // max(1, itemsize))


def _vmem_budget_bytes():
    # Per-TensorCore VMEM capacity minus headroom for compiler-internal
    # scratch, semaphores and temporaries.  Conservative 64 MiB fallback keeps
    # the sizing safe on v7x if the query is unavailable.
    cap = 64 * 1024 * 1024
    try:
        info = pltpu.get_tpu_info()
        cap = int(getattr(info, "vmem_capacity_bytes", cap))
    except Exception:
        pass
    return max(cap - 16 * 1024 * 1024, 24 * 1024 * 1024)


def _prenorm_kernel(x_ref, gamma_ref, beta_ref, w_ref, b_ref, o_ref, y_ref, *, d_true):
    # Per grid step (i = row tile, j = output-feature tile):
    #   x_ref:     (TM, Dp)   row tile (same block for every j)
    #   gamma_ref: (1, Dp)    LN scale (zero-padded past d_true)
    #   beta_ref:  (1, Dp)    LN shift (zero-padded past d_true)
    #   w_ref:     (Dp, TN)   Linear weight column slab for this j
    #   b_ref:     (1, TN)    Linear bias slab for this j
    #   o_ref:     (TM, TN)   output tile
    #   y_ref:     (TM, Dp)   VMEM scratch: normalized rows (matmul dtype)

    # --- LayerNorm once per row tile (j == 0), reused across all N tiles ---
    @pl.when(pl.program_id(1) == 0)
    def _():
        x = x_ref[...].astype(jnp.float32)
        inv_d = jnp.float32(1.0 / d_true)
        mean = jnp.sum(x, axis=-1, keepdims=True) * inv_d
        xc = x - mean
        if x_ref.shape[-1] != d_true:
            # Padded lanes hold x == 0, but (x - mean) != 0 there; mask so the
            # two-pass (centered) variance only sees the true feature dim.
            lane = jax.lax.broadcasted_iota(jnp.int32, x.shape, 1)
            xc = jnp.where(lane < d_true, xc, 0.0)
        var = jnp.sum(xc * xc, axis=-1, keepdims=True) * inv_d  # biased (PyTorch)
        inv = jax.lax.rsqrt(var + jnp.float32(EPS))              # EUP rsqrt
        g = gamma_ref[...].astype(jnp.float32)
        bt = beta_ref[...].astype(jnp.float32)
        # Invariant: gamma/beta are zero-padded past d_true, so y == 0 on
        # padded lanes and the K-padding contributes exactly zero to the dot.
        y_ref[...] = (xc * inv * g + bt).astype(y_ref.dtype)

    # --- fn: Linear(D, D) column slab on the MXU, f32 accumulation ---
    out = jnp.dot(y_ref[...], w_ref[...], preferred_element_type=jnp.float32)
    out = out + b_ref[...].astype(jnp.float32)
    o_ref[...] = out.astype(o_ref.dtype)


def prenorm_forward(x, gamma, beta, w, b, *, matmul_in_bf16=False):
    """PreNorm with fn = Linear(D, D):  Linear(LayerNorm(x)).

    x: (..., D); gamma/beta: (D,); w: (D, D) applied as y @ w; b: (D,).
    """
    orig_shape = x.shape
    D = orig_shape[-1]
    rows = 1
    for d in orig_shape[:-1]:
        rows *= d
    x2 = x.reshape(rows, D)

    # Optional bf16 matmul path for f32 weights (f32 matmuls run as multi-pass
    # bf16 on the MXU; this halves weight residency and ~3x's MXU throughput).
    w_mm = w.astype(jnp.bfloat16) if (matmul_in_bf16 and w.dtype == jnp.float32) else w

    # Lane-dense feature dim (multiple of 128).  Skip the pad entirely in the
    # common D % 128 == 0 case -- each pad/slice is an extra HBM round trip.
    Dp = _round_up(D, 128)
    pad_d = Dp - D
    if pad_d:
        xp = jnp.pad(x2, ((0, 0), (0, pad_d)))
        gp = jnp.pad(gamma, (0, pad_d)).reshape(1, Dp)
        btp = jnp.pad(beta, (0, pad_d)).reshape(1, Dp)
        wp = jnp.pad(w_mm, ((0, pad_d), (0, pad_d)))
        bp = jnp.pad(b, (0, pad_d)).reshape(1, Dp)
    else:
        xp = x2
        gp = gamma.reshape(1, Dp)
        btp = beta.reshape(1, Dp)
        wp = w_mm
        bp = b.reshape(1, Dp)

    x_item = jnp.dtype(x.dtype).itemsize
    w_item = jnp.dtype(wp.dtype).itemsize
    mm_item = w_item  # y scratch is stored in the matmul input dtype

    # N (output-feature) tiling of the weight: resident weight VMEM is
    # 2 * Dp * TN instead of 2 * Dp * Dp.
    TN = min(Dp, 512)
    n_steps = pl.cdiv(Dp, TN)

    # Row tile: as large as the VMEM budget allows (amortizes the ~0.35 us
    # per-step pipeline overhead), rounded to the dtype sublane pack, split
    # into >= 2 tiles when rows permit (v7x megacore).
    pack = _sublane_pack(x.dtype)
    budget = _vmem_budget_bytes()
    fixed = 2 * Dp * TN * w_item + 8 * Dp * 4 + (1 << 20)         # weights + params + slack
    per_row = Dp * (2 * x_item + mm_item + 3 * 4) + 2 * TN * x_item  # x/out bufs + y + f32 temps
    tm_max = max(pack, (budget - fixed) // per_row)
    # TODO(synk): if `fixed` alone exceeds the budget (enormous D), also tile K.
    TM = min(1024, int(tm_max), _round_up(pl.cdiv(rows, 2), pack))
    TM = max(pack, (TM // pack) * pack)

    # Rows are never padded in HBM; the ragged last row tile is handled by the
    # pl.cdiv grid + Pallas edge-block masking.  Only inputs smaller than one
    # tile get padded (block_shape may not exceed the array dim).
    rows_in = rows
    if rows < TM:
        xp = jnp.pad(xp, ((0, TM - rows), (0, 0)))
        rows_in = TM
    m_steps = pl.cdiv(rows_in, TM)

    needed = fixed + per_row * TM
    # Always pass an explicit limit (v5e's default scoped VMEM is 16 MiB), but
    # never request the full physical VMEM (headroom already removed in budget).
    vmem_limit = int(min(budget, max(needed + (4 << 20), 32 << 20)))

    cost = pl.CostEstimate(
        flops=2 * rows * Dp * Dp,
        transcendentals=rows,
        bytes_accessed=(rows * Dp * x_item * 2            # x in + out
                        + m_steps * Dp * Dp * w_item      # weight refetched per row tile
                        + 4 * Dp * 4),
    )

    out = pl.pallas_call(
        functools.partial(_prenorm_kernel, d_true=D),
        out_shape=jax.ShapeDtypeStruct((rows_in, Dp), x.dtype),
        grid_spec=pltpu.PrefetchScalarGridSpec(
            num_scalar_prefetch=0,
            grid=(m_steps, n_steps),
            in_specs=[
                pl.BlockSpec((TM, Dp), lambda i, j: (i, 0)),   # x row tile
                pl.BlockSpec((1, Dp), lambda i, j: (0, 0)),    # gamma
                pl.BlockSpec((1, Dp), lambda i, j: (0, 0)),    # beta
                pl.BlockSpec((Dp, TN), lambda i, j: (0, j)),   # weight column slab
                pl.BlockSpec((1, TN), lambda i, j: (0, j)),    # bias slab
            ],
            out_specs=pl.BlockSpec((TM, TN), lambda i, j: (i, j)),
            scratch_shapes=[pltpu.VMEM((TM, Dp), wp.dtype)],   # normalized rows
        ),
        compiler_params=pltpu.CompilerParams(
            # j==0 LN-scratch dependency => N axis must stay sequential.
            dimension_semantics=("parallel", "arbitrary"),
            vmem_limit_bytes=vmem_limit,
        ),
        cost_estimate=cost,
    )(xp, gp, btp, wp, bp)

    if rows_in != rows:
        out = out[:rows]
    if pad_d:
        out = out[:, :D]
    return out.reshape(orig_shape)


def prenorm_reference(x, gamma, beta, w, b):
    xf = x.astype(jnp.float32)
    mean = jnp.mean(xf, axis=-1, keepdims=True)
    var = jnp.mean((xf - mean) ** 2, axis=-1, keepdims=True)
    xn = (xf - mean) * jax.lax.rsqrt(var + EPS)
    y = xn * gamma + beta
    return (y @ w + b).astype(x.dtype)


if __name__ == "__main__":
    B, S, D = 2, 8, 32
    key = jax.random.PRNGKey(0)
    kx, kg, kb, kw, kbb = jax.random.split(key, 5)

    x = jax.random.normal(kx, (B, S, D), dtype=jnp.float32)
    # LayerNorm params (PyTorch init: gamma=1, beta=0; perturbed so the affine
    # path is exercised).
    gamma = jnp.ones((D,), jnp.float32) + 0.1 * jax.random.normal(kg, (D,))
    beta = 0.1 * jax.random.normal(kb, (D,))
    # fn = Linear(D, D) params.
    w = jax.random.normal(kw, (D, D), dtype=jnp.float32) / jnp.sqrt(D)
    b = 0.1 * jax.random.normal(kbb, (D,))

    out = prenorm_forward(x, gamma, beta, w, b)
    out = jax.block_until_ready(out)

    ref = prenorm_reference(x, gamma, beta, w, b)
    assert out.shape == (B, S, D)
    assert jnp.allclose(out, ref, atol=1e-4, rtol=1e-4), "mismatch vs reference"

    print("KERNEL_OK")
</pallas_src>

<mosaic_0001>
module attributes {stable_mosaic.version = 11 : i64} {
  func.func @_prenorm_kernel(%arg0: i32, %arg1: i32, %arg2: memref<8x128xf32, #tpu.memory_space<vmem>>, %arg3: memref<1x128xf32, #tpu.memory_space<vmem>>, %arg4: memref<1x128xf32, #tpu.memory_space<vmem>>, %arg5: memref<128x128xf32, #tpu.memory_space<vmem>>, %arg6: memref<1x128xf32, #tpu.memory_space<vmem>>, %arg7: memref<8x128xf32, #tpu.memory_space<vmem>>, %arg8: memref<8x128xf32, #tpu.memory_space<vmem>>) attributes {dimension_semantics = [#tpu.dimension_semantics<parallel>, #tpu.dimension_semantics<arbitrary>], iteration_bounds = array<i64: 2, 1>, scalar_prefetch = 0 : i64, scratch_operands = 1 : i64, tpu.core_type = #tpu.core_type<tc>, window_params = [{transform_indices = @transform_0, window_bounds = array<i64: 8, 128>}, {pipeline_mode = #tpu.pipeline_mode<synchronous>, transform_indices = @transform_1, window_bounds = array<i64: 1, 128>}, {pipeline_mode = #tpu.pipeline_mode<synchronous>, transform_indices = @transform_2, window_bounds = array<i64: 1, 128>}, {transform_indices = @transform_3, window_bounds = array<i64: 128, 128>}, {transform_indices = @transform_4, window_bounds = array<i64: 1, 128>}, {transform_indices = @transform_5, window_bounds = array<i64: 8, 128>}]} {
    %c0_i32 = arith.constant 0 : i32
    %0 = arith.cmpi eq, %arg1, %c0_i32 : i32
    %1 = arith.extui %0 : i1 to i32
    %c0_i32_0 = arith.constant 0 : i32
    %2 = arith.cmpi ne, %1, %c0_i32_0 : i32
    scf.if %2 {
      %c0_8 = arith.constant 0 : index
      %c0_9 = arith.constant 0 : index
      %10 = vector.load %arg2[%c0_8, %c0_9] : memref<8x128xf32, #tpu.memory_space<vmem>>, vector<8x128xf32>
      %cst_10 = arith.constant dense<0.000000e+00> : vector<8xf32>
      %11 = vector.multi_reduction <add>, %10, %cst_10 [1] : vector<8x128xf32> to vector<8xf32>
      %12 = vector.shape_cast %11 : vector<8xf32> to vector<8x1xf32>
      %cst_11 = arith.constant 3.125000e-02 : f32
      %13 = vector.broadcast %cst_11 : f32 to vector<8x1xf32>
      %14 = arith.mulf %12, %13 : vector<8x1xf32>
      %15 = vector.broadcast %14 : vector<8x1xf32> to vector<8x128xf32>
      %16 = arith.subf %10, %15 : vector<8x128xf32>
      %17 = tpu.iota {dimensions = array<i32: 1>} : vector<8x128xi32>
      %c32_i32 = arith.constant 32 : i32
      %18 = vector.broadcast %c32_i32 : i32 to vector<8x128xi32>
      %19 = arith.cmpi slt, %17, %18 : vector<8x128xi32>
      %cst_12 = arith.constant 0.000000e+00 : f32
      %20 = vector.broadcast %cst_12 : f32 to vector<8x128xf32>
      %21 = arith.select %19, %16, %20 : vector<8x128xi1>, vector<8x128xf32>
      %22 = arith.mulf %21, %21 : vector<8x128xf32>
      %cst_13 = arith.constant dense<0.000000e+00> : vector<8xf32>
      %23 = vector.multi_reduction <add>, %22, %cst_13 [1] : vector<8x128xf32> to vector<8xf32>
      %24 = vector.shape_cast %23 : vector<8xf32> to vector<8x1xf32>
      %cst_14 = arith.constant 3.125000e-02 : f32
      %25 = vector.broadcast %cst_14 : f32 to vector<8x1xf32>
      %26 = arith.mulf %24, %25 : vector<8x1xf32>
      %cst_15 = arith.constant 9.99999974E-6 : f32
      %27 = vector.broadcast %cst_15 : f32 to vector<8x1xf32>
      %28 = arith.addf %26, %27 : vector<8x1xf32>
      %29 = math.rsqrt %28 : vector<8x1xf32>
      %c0_16 = arith.constant 0 : index
      %c0_17 = arith.constant 0 : index
      %30 = vector.load %arg3[%c0_16, %c0_17] : memref<1x128xf32, #tpu.memory_space<vmem>>, vector<1x128xf32>
      %c0_18 = arith.constant 0 : index
      %c0_19 = arith.constant 0 : index
      %31 = vector.load %arg4[%c0_18, %c0_19] : memref<1x128xf32, #tpu.memory_space<vmem>>, vector<1x128xf32>
      %32 = vector.broadcast %29 : vector<8x1xf32> to vector<8x128xf32>
      %33 = arith.mulf %21, %32 : vector<8x128xf32>
      %34 = vector.broadcast %30 : vector<1x128xf32> to vector<8x128xf32>
      %35 = arith.mulf %33, %34 : vector<8x128xf32>
      %36 = vector.broadcast %31 : vector<1x128xf32> to vector<8x128xf32>
      %37 = arith.addf %35, %36 : vector<8x128xf32>
      %c0_20 = arith.constant 0 : index
      %c0_21 = arith.constant 0 : index
      %38 = vector.load %arg8[%c0_20, %c0_21] : memref<8x128xf32, #tpu.memory_space<vmem>>, vector<8x128xf32>
      tpu.vector_store %arg8[%c0_20, %c0_21], %37 {strides = array<i32>} : memref<8x128xf32, #tpu.memory_space<vmem>>, vector<8x128xf32>,
    } else {
    }
    %c0 = arith.constant 0 : index
    %c0_1 = arith.constant 0 : index
    %3 = vector.load %arg8[%c0, %c0_1] : memref<8x128xf32, #tpu.memory_space<vmem>>, vector<8x128xf32>
    %c0_2 = arith.constant 0 : index
    %c0_3 = arith.constant 0 : index
    %4 = vector.load %arg5[%c0_2, %c0_3] : memref<128x128xf32, #tpu.memory_space<vmem>>, vector<128x128xf32>
    %cst = arith.constant dense<0.000000e+00> : vector<8x128xf32>
    %5 = tpu.matmul %3, %4, %cst {dimension_numbers = #tpu.dot_dimension_numbers<[1], [0], [0], [1], [0, 0, 1, 1], [], []>} : vector<8x128xf32>, vector<128x128xf32>, vector<8x128xf32> -> vector<8x128xf32>
    %c0_4 = arith.constant 0 : index
    %c0_5 = arith.constant 0 : index
    %6 = vector.load %arg6[%c0_4, %c0_5] : memref<1x128xf32, #tpu.memory_space<vmem>>, vector<1x128xf32>
    %7 = vector.broadcast %6 : vector<1x128xf32> to vector<8x128xf32>
    %8 = arith.addf %5, %7 : vector<8x128xf32>
    %c0_6 = arith.constant 0 : index
    %c0_7 = arith.constant 0 : index
    %9 = vector.load %arg7[%c0_6, %c0_7] : memref<8x128xf32, #tpu.memory_space<vmem>>, vector<8x128xf32>
    tpu.vector_store %arg7[%c0_6, %c0_7], %8 {strides = array<i32>} : memref<8x128xf32, #tpu.memory_space<vmem>>, vector<8x128xf32>,
    return
  }
  func.func @transform_0(%arg0: i32, %arg1: i32) -> (i32, i32) {
    %c0_i32 = arith.constant 0 : i32
    %c0_i32_0 = arith.constant 0 : i32
    return %arg0, %c0_i32 : i32, i32
  }
  func.func @transform_1(%arg0: i32, %arg1: i32) -> (i32, i32) {
    %c0_i32 = arith.constant 0 : i32
    %c0_i32_0 = arith.constant 0 : i32
    %c0_i32_1 = arith.constant 0 : i32
    return %c0_i32, %c0_i32_0 : i32, i32
  }
  func.func @transform_2(%arg0: i32, %arg1: i32) -> (i32, i32) {
    %c0_i32 = arith.constant 0 : i32
    %c0_i32_0 = arith.constant 0 : i32
    %c0_i32_1 = arith.constant 0 : i32
    return %c0_i32, %c0_i32_0 : i32, i32
  }
  func.func @transform_3(%arg0: i32, %arg1: i32) -> (i32, i32) {
    %c0_i32 = arith.constant 0 : i32
    %c0_i32_0 = arith.constant 0 : i32
    return %c0_i32, %arg1 : i32, i32
  }
  func.func @transform_4(%arg0: i32, %arg1: i32) -> (i32, i32) {
    %c0_i32 = arith.constant 0 : i32
    %c0_i32_0 = arith.constant 0 : i32
    return %c0_i32, %arg1 : i32, i32
  }
  func.func @transform_5(%arg0: i32, %arg1: i32) -> (i32, i32) {
    %c0_i32 = arith.constant 0 : i32
    return %arg0, %arg1 : i32, i32
  }
}

</mosaic_0001>

<llo_original>
// kernel: tpu_custom_call.1
$region0: #{tpu_custom_call.1}
  #allocation0 [shape = 'u32[]', space=smem, size = 0x4, offset = 0x4, fixed_abs, tag = 'smem constant byte address 0x4 - core index']
  #allocation1 [shape = 'u32[144,128]{1,0:T(1,128)}', space=vmem, size = 0x12000, scoped, tag = 'internal scratch']
  #allocation2 [shape = 'f32[8,128]{1,0:T(8,128)}', space=vmem, size = 0x1000, scoped, tag = 'scratch operand']
  %s0 = inlined_call_operand.hbm [shape: f32[16,128], index: 0, kind: input, shape index: {}]
  %s1 = inlined_call_operand.vmem [shape: f32[1,128], index: 1, kind: input, shape index: {}]
  %s2 = inlined_call_operand.vmem [shape: f32[1,128], index: 2, kind: input, shape index: {}]
  %s3 = inlined_call_operand.hbm [shape: f32[128,128], index: 3, kind: input, shape index: {}]
  %s4 = inlined_call_operand.vmem [shape: f32[1,128], index: 4, kind: input, shape index: {}]
  %s5 = inlined_call_operand.hbm [shape: f32[16,128], index: 5, kind: output, shape index: {}]
  %s6 = sld [smem:[#allocation0]]
  $region65: #{tpu_custom_call.1} parent=0
    _
  %s8 = ssub.s32 1, %s6
  %s9 = scalar_select 0, %s8, %s6
  $region1: #{tpu_custom_call.1} parent=0
    #allocation3 [shape = 'u8[8192]{0}', space=vmem, size = 0x2000, scoped, tag = 'input window, operand 0']
    #allocation4 [shape = 's32[2]{0}', space=sflag, size = 0x8, scoped, tag = 'scoped memory for tpu_custom_call.1']
    #allocation5 [shape = 's32[2]{0}', space=sflag, size = 0x8, scoped, tag = 'scoped memory for tpu_custom_call.1']
    #allocation6 [shape = 'u8[65536]{0}', space=vmem, size = 0x10000, scoped, tag = 'input window, operand 3, single buffered']
    #allocation7 [shape = 's32[1]{0}', space=sflag, size = 0x4, scoped, tag = 'scoped memory for tpu_custom_call.1']
    #allocation8 [shape = 'u8[8192]{0}', space=vmem, size = 0x2000, scoped, tag = 'output window, operand 0']
    %10 = vsyncpa [#allocation4], 0
    %s11 = scalar_lea.sflag [#allocation4], 1
    %12 = vsyncpa %s11, 0
    %13 = vsyncpa [#allocation7], 0
    %14 = vsyncpa [#allocation5], 0
    %s15 = scalar_lea.sflag [#allocation5], 1
    %16 = vsyncpa %s15, 0
    loop: start=0, step=1, limit=4
    $region2: #{tpu_custom_call.1} parent=1 // loop_pre_header
      _
    $region3: #{tpu_custom_call.1} parent=1 // loop_header
      %s18 = sphi 0, %s22
      %p19 = scmp.ge.s32.totalorder %s18, 4
      %s25 = sphi 0, %s37
      %s26 = sphi 0, %s33
      %s27 = sphi 0, %s25
      %s28 = sphi 0, %s26
      %s29 = sphi 0, %s27
      %s30 = sphi 0, %s28
      %s40 = sphi 0, %s42
      %s43 = sphi 0, %s40
      %s44 = sphi 0, %s43
      %s60 = sphi 0, %s44
      %s64 = sphi 0, %s64
      %s66 = sphi 0, %s64
      %s67 = sphi 0, %s66
      %s81 = sphi 0, %s67
      %s85 = sphi 0, %s85
      %s87 = sphi 0, %s85
      %s88 = sphi 0, %s87
      %s102 = sphi 0, %s88
      %s108 = sphi 0, %s110
      %s111 = sphi 0, %s108
      %s112 = sphi 0, %s111
      %s128 = sphi 0, %s112
      %s134 = sphi 0, %s136
      %s137 = sphi 0, %s134
      %s138 = sphi 0, %s137
      %s154 = sphi 0, %s138
      %s162 = sphi 0, %s164
      %s165 = sphi 0, %s162
      %s166 = sphi 0, %s165
      %s182 = sphi 0, %s166
    $region4: #{tpu_custom_call.1} parent=1 // loop_header_branch
      %21 = sbr.rel (%p19) target = $region8
    $region5: #{tpu_custom_call.1} parent=1 // loop_body
      %s23 = ssub.s32 %s18, 1
      %s24 = ssub.s32 %s18, 2
      %s31 = sadd.s32 1, %s26
      %p32 = scmp.ge.s32.totalorder %s31, 1
      %s33 = scalar_select %p32, 0, %s31
      %s34 = sadd.s32 1, %s25
      %s35 = scalar_select %p32, %s34, %s25
      %p36 = scmp.ge.s32.totalorder %s35, 2
      %s37 = scalar_select %p36, 0, %s35
      %s38 = ssub.s32 %s25, %s37
      %p39 = scmp.eq.s32.totalorder %s38, 0
      %s41 = sadd.s32 %s40, 1
      %s42 = scalar_select %p39, %s40, %s41
      %p45 = pneg %p39
      %p46 = scmp.eq.s32.totalorder %s18, 1
      %p47 = por %p45, %p46
      %p48 = scmp.ne.s32.totalorder %s40, %s43
      %p49 = scmp.eq.s32.totalorder %s18, 0
      %p50 = por %p48, %p49
      %p51 = scmp.ne.s32.totalorder %s40, %s43
      %p52 = scmp.eq.s32.totalorder %s23, 1
      %p53 = por %p51, %p52
      %p54 = scmp.ne.s32.totalorder %s43, %s44
      %p55 = scmp.eq.s32.totalorder %s23, 0
      %p56 = por %p54, %p55
      %p57 = scmp.ne.s32.totalorder %s43, %s44
      %p58 = scmp.eq.s32.totalorder %s24, 1
      %p59 = por %p57, %p58
      %p61 = scmp.ne.s32.totalorder %s44, %s60
      %p62 = scmp.eq.s32.totalorder %s24, 0
      %p63 = por %p61, %p62
      %s65 = sadd.s32 %s64, 1
      %p68 = scmp.eq.s32.totalorder %s18, 1
      %p69 = scmp.ne.s32.totalorder %s64, %s66
      %p70 = scmp.eq.s32.totalorder %s18, 0
      %p71 = por %p69, %p70
      %p72 = scmp.ne.s32.totalorder %s64, %s66
      %p73 = scmp.eq.s32.totalorder %s23, 1
      %p74 = por %p72, %p73
      %p75 = scmp.ne.s32.totalorder %s66, %s67
      %p76 = scmp.eq.s32.totalorder %s23, 0
      %p77 = por %p75, %p76
      %p78 = scmp.ne.s32.totalorder %s66, %s67
      %p79 = scmp.eq.s32.totalorder %s24, 1
      %p80 = por %p78, %p79
      %p82 = scmp.ne.s32.totalorder %s67, %s81
      %p83 = scmp.eq.s32.totalorder %s24, 0
      %p84 = por %p82, %p83
      %s86 = sadd.s32 %s85, 1
      %p89 = scmp.eq.s32.totalorder %s18, 1
      %p90 = scmp.ne.s32.totalorder %s85, %s87
      %p91 = scmp.eq.s32.totalorder %s18, 0
      %p92 = por %p90, %p91
      %p93 = scmp.ne.s32.totalorder %s85, %s87
      %p94 = scmp.eq.s32.totalorder %s23, 1
      %p95 = por %p93, %p94
      %p96 = scmp.ne.s32.totalorder %s87, %s88
      %p97 = scmp.eq.s32.totalorder %s23, 0
      %p98 = por %p96, %p97
      %p99 = scmp.ne.s32.totalorder %s87, %s88
      %p100 = scmp.eq.s32.totalorder %s24, 1
      %p101 = por %p99, %p100
      %p103 = scmp.ne.s32.totalorder %s88, %s102
      %p104 = scmp.eq.s32.totalorder %s24, 0
      %p105 = por %p103, %p104
      %s106 = ssub.s32 %s26, %s33
      %p107 = scmp.eq.s32.totalorder %s106, 0
      %s109 = sadd.s32 %s108, 1
      %s110 = scalar_select %p107, %s108, %s109
      %p113 = pneg %p107
      %p114 = scmp.eq.s32.totalorder %s18, 1
      %p115 = por %p113, %p114
      %p116 = scmp.ne.s32.totalorder %s108, %s111
      %p117 = scmp.eq.s32.totalorder %s18, 0
      %p118 = por %p116, %p117
      %p119 = scmp.ne.s32.totalorder %s108, %s111
      %p120 = scmp.eq.s32.totalorder %s23, 1
      %p121 = por %p119, %p120
      %p122 = scmp.ne.s32.totalorder %s111, %s112
      %p123 = scmp.eq.s32.totalorder %s23, 0
      %p124 = por %p122, %p123
      %p125 = scmp.ne.s32.totalorder %s111, %s112
      %p126 = scmp.eq.s32.totalorder %s24, 1
      %p127 = por %p125, %p126
      %p129 = scmp.ne.s32.totalorder %s112, %s128
      %p130 = scmp.eq.s32.totalorder %s24, 0
      %p131 = por %p129, %p130
      %s132 = ssub.s32 %s26, %s33
      %p133 = scmp.eq.s32.totalorder %s132, 0
      %s135 = sadd.s32 %s134, 1
      %s136 = scalar_select %p133, %s134, %s135
      %p139 = pneg %p133
      %p140 = scmp.eq.s32.totalorder %s18, 1
      %p141 = por %p139, %p140
      %p142 = scmp.ne.s32.totalorder %s134, %s137
      %p143 = scmp.eq.s32.totalorder %s18, 0
      %p144 = por %p142, %p143
      %p145 = scmp.ne.s32.totalorder %s134, %s137
      %p146 = scmp.eq.s32.totalorder %s23, 1
      %p147 = por %p145, %p146
      %p148 = scmp.ne.s32.totalorder %s137, %s138
      %p149 = scmp.eq.s32.totalorder %s23, 0
      %p150 = por %p148, %p149
      %p151 = scmp.ne.s32.totalorder %s137, %s138
      %p152 = scmp.eq.s32.totalorder %s24, 1
      %p153 = por %p151, %p152
      %p155 = scmp.ne.s32.totalorder %s138, %s154
      %p156 = scmp.eq.s32.totalorder %s24, 0
      %p157 = por %p155, %p156
      %s158 = ssub.s32 %s25, %s37
      %s159 = ssub.s32 %s26, %s33
      %s160 = sor.u32 %s158, %s159
      %p161 = scmp.eq.s32.totalorder %s160, 0
      %s163 = sadd.s32 %s162, 1
      %s164 = scalar_select %p161, %s162, %s163
      %p167 = pneg %p161
      %p168 = scmp.eq.s32.totalorder %s18, 1
      %p169 = por %p167, %p168
      %p170 = scmp.ne.s32.totalorder %s162, %s165
      %p171 = scmp.eq.s32.totalorder %s18, 0
      %p172 = por %p170, %p171
      %p173 = scmp.ne.s32.totalorder %s162, %s165
      %p174 = scmp.eq.s32.totalorder %s23, 1
      %p175 = por %p173, %p174
      %p176 = scmp.ne.s32.totalorder %s165, %s166
      %p177 = scmp.eq.s32.totalorder %s23, 0
      %p178 = por %p176, %p177
      %p179 = scmp.ne.s32.totalorder %s165, %s166
      %p180 = scmp.eq.s32.totalorder %s24, 1
      %p181 = por %p179, %p180
      %p183 = scmp.ne.s32.totalorder %s166, %s182
      %p184 = scmp.eq.s32.totalorder %s24, 0
      %p185 = por %p183, %p184
      %p186 = scmp.le.s32.totalorder 1, %s18
      %p187 = scmp.lt.s32.totalorder %s18, 3
      %p188 = pnand %p186, %p187
      %p189 = pneg %p188
      // Predicated region
      $region9: #{tpu_custom_call.1} parent=5 // pred_check
        _
      $region10: #{tpu_custom_call.1} parent=5 // pred_check_branch
        %191 = sbr.rel (%p188) target = $region12
      $region11: #{tpu_custom_call.1} parent=5 // pred_region
        %s192 = ssub.s32 %s18, 1
        // Predicated region
        $region13: #{tpu_custom_call.1} parent=11 // pred_check
          %p193 = pneg %p77
        $region14: #{tpu_custom_call.1} parent=11 // pred_check_branch
          %195 = sbr.rel (%p193) target = $region16
        $region15: #{tpu_custom_call.1} parent=11 // pred_region
          _
        $region16: #{tpu_custom_call.1} parent=11 // pred_fallthru
          _
        // Predicated region
        $region17: #{tpu_custom_call.1} parent=11 // pred_check
          %p196 = pneg %p98
        $region18: #{tpu_custom_call.1} parent=11 // pred_check_branch
          %198 = sbr.rel (%p196) target = $region20
        $region19: #{tpu_custom_call.1} parent=11 // pred_region
          _
        $region20: #{tpu_custom_call.1} parent=11 // pred_fallthru
          _
        // Predicated region
        $region21: #{tpu_custom_call.1} parent=11 // pred_check
          %p199 = pneg %p124
        $region22: #{tpu_custom_call.1} parent=11 // pred_check_branch
          %201 = sbr.rel (%p199) target = $region24
        $region23: #{tpu_custom_call.1} parent=11 // pred_region
          %s203 = ssub.s32 2048, 2048
          %204 = vsyncadd [#allocation7], %s203
          %s205 = smul.addr %s28, 128
          %s206 = scalar_lea.hbm %s3, %s205
          %s207 = sshll.u32 [#allocation6], 4
          %s208 = int_to_ptr.vmem [resolvable:$true] %s207
          %213 = dma.hbm_to_vmem [thread:$0]  %s206, 2048, %s208, [#allocation7], 128, 128, 8
        $region24: #{tpu_custom_call.1} parent=11 // pred_fallthru
          _
        // Predicated region
        $region25: #{tpu_custom_call.1} parent=11 // pred_check
          %p214 = pneg %p150
        $region26: #{tpu_custom_call.1} parent=11 // pred_check_branch
          %216 = sbr.rel (%p214) target = $region28
        $region27: #{tpu_custom_call.1} parent=11 // pred_region
          %p217 = scmp.lt.s32.totalorder %s28, 0
          %s218 = scalar_select %p217, %s28, 0
          %s219 = scalar_lea.vmem %s4, %s218
        $region28: #{tpu_custom_call.1} parent=11 // pred_fallthru
          _
      $region12: #{tpu_custom_call.1} parent=5 // pred_fallthru
        _
      %p220 = scmp.lt.s32.totalorder %s18, 2
      // Predicated region
      $region29: #{tpu_custom_call.1} parent=5 // pred_check
        %p221 = pneg %p220
      $region30: #{tpu_custom_call.1} parent=5 // pred_check_branch
        %223 = sbr.rel (%p221) target = $region32
      $region31: #{tpu_custom_call.1} parent=5 // pred_region
        // Predicated region
        $region33: #{tpu_custom_call.1} parent=31 // pred_check
          %p224 = pneg %p50
        $region34: #{tpu_custom_call.1} parent=31 // pred_check_branch
          %226 = sbr.rel (%p224) target = $region36
        $region35: #{tpu_custom_call.1} parent=31 // pred_region
          %s227 = sand.u32 %s40, 1
          %s228 = scalar_lea.sflag [#allocation4], %s227
          %s229 = sand.u32 %s40, 1
          %s230 = smul.addr %s229, 8
          %s231 = scalar_lea.vmem [#allocation3], %s230
          %s233 = ssub.s32 128, 128
          %234 = vsyncadd %s228, %s233
          %s235 = smul.addr %s25, 128
          %s236 = scalar_lea.hbm %s0, %s235
          %s238 = sshll.u32 %s231, 4
          %s239 = int_to_ptr.vmem [resolvable:$true] %s238
          %241 = dma.hbm_to_vmem [thread:$0]  %s236, 128, %s239, %s228
        $region36: #{tpu_custom_call.1} parent=31 // pred_fallthru
          _
      $region32: #{tpu_custom_call.1} parent=5 // pred_fallthru
        _
      %p242 = scmp.le.s32.totalorder 1, %s18
      %p243 = scmp.lt.s32.totalorder %s18, 3
      %p244 = pnand %p242, %p243
      %p245 = pneg %p244
      // Predicated region
      $region37: #{tpu_custom_call.1} parent=5 // pred_check
        _
      $region38: #{tpu_custom_call.1} parent=5 // pred_check_branch
        %247 = sbr.rel (%p244) target = $region40
      $region39: #{tpu_custom_call.1} parent=5 // pred_region
        %s248 = ssub.s32 %s18, 1
        %s249 = sand.u32 %s43, 1
        %s250 = scalar_lea.sflag [#allocation4], %s249
        %s251 = sand.u32 %s43, 1
        %s252 = smul.addr %s251, 8
        %s253 = scalar_lea.vmem [#allocation3], %s252
        // Predicated region
        $region41: #{tpu_custom_call.1} parent=39 // pred_check
          %p254 = pneg %p56
        $region42: #{tpu_custom_call.1} parent=39 // pred_check_branch
          %256 = sbr.rel (%p254) target = $region44
        $region43: #{tpu_custom_call.1} parent=39 // pred_region
          %257 = dma.done %s250, 128
        $region44: #{tpu_custom_call.1} parent=39 // pred_fallthru
          _
        // Predicated region
        $region45: #{tpu_custom_call.1} parent=39 // pred_check
          %p258 = pneg %p124
        $region46: #{tpu_custom_call.1} parent=39 // pred_check_branch
          %260 = sbr.rel (%p258) target = $region48
        $region47: #{tpu_custom_call.1} parent=39 // pred_region
          %261 = dma.done [#allocation7], 2048
        $region48: #{tpu_custom_call.1} parent=39 // pred_fallthru
          _
        %s262 = sand.u32 %s43, 1
        %s263 = scalar_lea.sflag [#allocation4], %s262
        %s264 = sand.u32 %s43, 1
        %s265 = smul.addr %s264, 8
        %s266 = scalar_lea.vmem [#allocation3], %s265
        %p267 = pneg %p56
        %p268 = pneg %p53
        %p269 = pneg %p77
        %p270 = pneg %p74
        %p271 = pneg %p98
        %p272 = pneg %p95
        %p273 = pneg %p124
        %p274 = pneg %p121
        %p275 = scmp.lt.s32.totalorder %s28, 0
        %s276 = scalar_select %p275, %s28, 0
        %s277 = scalar_lea.vmem %s4, %s276
        %p278 = pneg %p150
        %p279 = pneg %p147
        %p280 = pneg %p178
        %p281 = pneg %p175
        %s282 = sand.u32 %s165, 1
        %s283 = scalar_lea.sflag [#allocation5], %s282
        %s284 = sand.u32 %s165, 1
        %s285 = smul.addr %s284, 8
        %s286 = scalar_lea.vmem [#allocation8], %s285
        %p287 = scmp.lt.s32.totalorder %s28, 0
        %s288 = scalar_select %p287, %s28, 0
        %s289 = scalar_lea.vmem %s4, %s288
        %p290 = scmp.eq.s32.totalorder %s28, 0
        // Predicated region
        $region49: #{tpu_custom_call.1} parent=39 // pred_check
          %p291 = pneg %p290
        $region50: #{tpu_custom_call.1} parent=39 // pred_check_branch
          %293 = sbr.rel (%p291) target = $region52
        $region51: #{tpu_custom_call.1} parent=39 // pred_region
          %v294 = vld [vmem:[%s253] sm:$0xff]
          %295 = vadd.xlane.f32.xlu0 %v294
          %v296 = vpop.xlane.xlu0 %295
          %v297 = vmul.f32 %v296, 0.03125
          %v298 = vsub.f32 %v294, %v297
          %v299 = vlaneseq
          %v300 = vand.u32 %v299, 127
          %vm301 = vcmp.lt.s32.totalorder %v300, 32
          %v302 = vsel %vm301, %v298, 0.0
          %v303 = vmul.f32 %v302, %v302
          %304 = vadd.xlane.f32.xlu0 %v303
          %v305 = vpop.xlane.xlu0 %304
          %v306 = vmul.f32 %v305, 0.03125
          %v307 = vadd.f32 %v306, 1e-05
          %v308 = vrsqrt.pop %v307
          %v309 = vld [vmem:[%s1] sm:$0x1]
          %v310 = vld [vmem:[%s2] sm:$0x1]
          %v311 = vmul.f32 %v302, %v308
          %v313 = vlaneseq
          %v314 = vshrl.u32 %v313, 7
          %v315 = vsub.s32 0, %v314
          %v316 = vrot.slane %v309, %v315
          %v318 = vmul.f32 %v311, %v316
          %v320 = vlaneseq
          %v321 = vshrl.u32 %v320, 7
          %v322 = vsub.s32 0, %v321
          %v323 = vrot.slane %v310, %v322
          %v325 = vadd.f32 %v318, %v323
          %326 = vst [vmem:[#allocation2] sm:$0xff] %v325
        $region52: #{tpu_custom_call.1} parent=39 // pred_fallthru
          _
        %v327 = vld [vmem:[#allocation2] sm:$0xff]
        %v328 = vld [vmem:[#allocation6] sm:$0xff]
        %v329 = vld [vmem:[#allocation6 + $0x8] sm:$0xff]
        %v330 = vld [vmem:[#allocation6 + $0x10] sm:$0xff]
        %v331 = vld [vmem:[#allocation6 + $0x18] sm:$0xff]
        %v332 = vld [vmem:[#allocation6 + $0x20] sm:$0xff]
        %v333 = vld [vmem:[#allocation6 + $0x28] sm:$0xff]
        %v334 = vld [vmem:[#allocation6 + $0x30] sm:$0xff]
        %v335 = vld [vmem:[#allocation6 + $0x38] sm:$0xff]
        %v336 = vld [vmem:[#allocation6 + $0x40] sm:$0xff]
        %v337 = vld [vmem:[#allocation6 + $0x48] sm:$0xff]
        %v338 = vld [vmem:[#allocation6 + $0x50] sm:$0xff]
        %v339 = vld [vmem:[#allocation6 + $0x58] sm:$0xff]
        %v340 = vld [vmem:[#allocation6 + $0x60] sm:$0xff]
        %v341 = vld [vmem:[#allocation6 + $0x68] sm:$0xff]
        %v342 = vld [vmem:[#allocation6 + $0x70] sm:$0xff]
        %v343 = vld [vmem:[#allocation6 + $0x78] sm:$0xff]
        %v344 = vld [vmem:[%s289] sm:$0x1]
        %v346 = vlaneseq
        %v347 = vshrl.u32 %v346, 7
        %v348 = vsub.s32 0, %v347
        %v349 = vrot.slane %v344, %v348
        %351 = vmatprep.subr.mxu0 0.0
        %352 = vmatpush1.msra.mxu0 %v328
        %353 = vmatprep.subr.mxu0 0.0
        %354 = vmatpush1.msra.mxu0 %v329
        %355 = vmatprep.subr.mxu0 0.0
        %356 = vmatpush1.msra.mxu0 %v330
        %357 = vmatprep.subr.mxu0 0.0
        %358 = vmatpush1.msra.mxu0 %v331
        %359 = vmatprep.subr.mxu0 0.0
        %360 = vmatpush1.msra.mxu0 %v332
        %361 = vmatprep.subr.mxu0 0.0
        %362 = vmatpush1.msra.mxu0 %v333
        %363 = vmatprep.subr.mxu0 0.0
        %364 = vmatpush1.msra.mxu0 %v334
        %365 = vmatprep.subr.mxu0 0.0
        %366 = vmatpush1.msra.mxu0 %v335
        %367 = vmatprep.subr.mxu0 0.0
        %368 = vmatpush1.msra.mxu0 %v336
        %369 = vmatprep.subr.mxu0 0.0
        %370 = vmatpush1.msra.mxu0 %v337
        %371 = vmatprep.subr.mxu0 0.0
        %372 = vmatpush1.msra.mxu0 %v338
        %373 = vmatprep.subr.mxu0 0.0
        %374 = vmatpush1.msra.mxu0 %v339
        %375 = vmatprep.subr.mxu0 0.0
        %376 = vmatpush1.msra.mxu0 %v340
        %377 = vmatprep.subr.mxu0 0.0
        %378 = vmatpush1.msra.mxu0 %v341
        %379 = vmatprep.subr.mxu0 0.0
        %380 = vmatpush1.msra.mxu0 %v342
        %381 = vmatprep.subr.mxu0 0.0
        %382 = vmatpush1.msra.mxu0 %v343
        %383 = vmatprep.subr.mxu0 0.0
        %384 = vmatpush1.msra.mxu0 0.0
        %385 = vmatprep.subr.mxu0 0.0
        %386 = vmatpush1.msra.mxu0 0.0
        %387 = vmatprep.subr.mxu0 0.0
        %388 = vmatpush1.msra.mxu0 0.0
        %389 = vmatprep.subr.mxu0 0.0
        %390 = vmatpush1.msra.mxu0 0.0
        %391 = vmatprep.subr.mxu0 0.0
        %392 = vmatpush1.msra.mxu0 0.0
        %393 = vmatprep.subr.mxu0 0.0
        %394 = vmatpush1.msra.mxu0 0.0
        %395 = vmatprep.subr.mxu0 0.0
        %396 = vmatpush1.msra.mxu0 0.0
        %397 = vmatprep.subr.mxu0 0.0
        %398 = vmatpush1.msra.mxu0 0.0
        %399 = vmatprep.subr.mxu0 0.0
        %400 = vmatpush1.msra.mxu0 0.0
        %401 = vmatprep.subr.mxu0 0.0
        %402 = vmatpush1.msra.mxu0 0.0
        %403 = vmatprep.subr.mxu0 0.0
        %404 = vmatpush1.msra.mxu0 0.0
        %405 = vmatprep.subr.mxu0 0.0
        %406 = vmatpush1.msra.mxu0 0.0
        %407 = vmatprep.subr.mxu0 0.0
        %408 = vmatpush1.msra.mxu0 0.0
        %409 = vmatprep.subr.mxu0 0.0
        %410 = vmatpush1.msra.mxu0 0.0
        %411 = vmatprep.subr.mxu0 0.0
        %412 = vmatpush1.msra.mxu0 0.0
        %413 = vmatprep.subr.mxu0 0.0
        %414 = vmatpush1.msra.mxu0 0.0
        %415 = vmatprep.mubr.f32.mxu0 0.0
        %416 = vmatmul.mubr.f32.gmra.mrb[0].mxu0 %v327
        %v417 = vpop.f32.mrb[0].mxu0
        %v418 = vadd.f32 %v349, %v417
        %v419 = vpop.f32.mrb[0].mxu0
        %420 = vdwg.mxu0
        %421 = vst [vmem:[%s286] sm:$0xff] %v418
        %s422 = sand.u32 %s165, 1
        %s423 = scalar_lea.sflag [#allocation5], %s422
        %s424 = sand.u32 %s165, 1
        %s425 = smul.addr %s424, 8
        %s426 = scalar_lea.vmem [#allocation8], %s425
        // Predicated region
        $region53: #{tpu_custom_call.1} parent=39 // pred_check
          %p427 = pneg %p175
        $region54: #{tpu_custom_call.1} parent=39 // pred_check_branch
          %429 = sbr.rel (%p427) target = $region56
        $region55: #{tpu_custom_call.1} parent=39 // pred_region
          %s431 = ssub.s32 128, 128
          %432 = vsyncadd %s423, %s431
          %s433 = sadd.s32 %s28, %s27
          %s434 = smul.addr %s433, 128
          %s435 = scalar_lea.hbm %s5, %s434
          %s437 = sshll.u32 %s426, 4
          %s438 = int_to_ptr.vmem [resolvable:$true] %s437
          %440 = dma.vmem_to_hbm [thread:$0]  %s438, 128, %s435, %s423
        $region56: #{tpu_custom_call.1} parent=39 // pred_fallthru
          _
      $region40: #{tpu_custom_call.1} parent=5 // pred_fallthru
        _
      %p441 = scmp.le.s32.totalorder 2, %s18
      // Predicated region
      $region57: #{tpu_custom_call.1} parent=5 // pred_check
        %p442 = pneg %p441
      $region58: #{tpu_custom_call.1} parent=5 // pred_check_branch
        %444 = sbr.rel (%p442) target = $region60
      $region59: #{tpu_custom_call.1} parent=5 // pred_region
        %s445 = ssub.s32 %s18, 2
        // Predicated region
        $region61: #{tpu_custom_call.1} parent=59 // pred_check
          %p446 = pneg %p181
        $region62: #{tpu_custom_call.1} parent=59 // pred_check_branch
          %448 = sbr.rel (%p446) target = $region64
        $region63: #{tpu_custom_call.1} parent=59 // pred_region
          %s449 = sand.u32 %s166, 1
          %s450 = scalar_lea.sflag [#allocation5], %s449
          %s451 = sand.u32 %s166, 1
          %s452 = smul.addr %s451, 8
          %s453 = scalar_lea.vmem [#allocation8], %s452
          %454 = dma.done %s450, 128
        $region64: #{tpu_custom_call.1} parent=59 // pred_fallthru
          _
      $region60: #{tpu_custom_call.1} parent=5 // pred_fallthru
        _
    $region6: #{tpu_custom_call.1} parent=1 // loop_footer
      %s22 = sadd.s32 1, %s18
    $region7: #{tpu_custom_call.1} parent=1 // loop_footer_branch
      %17 = sbr.rel target = $region3
    $region8: #{tpu_custom_call.1} parent=1 // loop_exit
      _
    %455 = vsyncpa [#allocation4], 1
    %s456 = scalar_lea.sflag [#allocation4], 1
    %457 = vsyncpa %s456, 1
    %458 = vsyncpa [#allocation7], 1
    %459 = vsyncpa [#allocation5], 1
    %s460 = scalar_lea.sflag [#allocation5], 1
    %461 = vsyncpa %s460, 1

</llo_original>
